<compile_context>
chip_gen: v5e
topology: v5e:2x2
jax: 0.10.0
libtpu: 0.0.40
codegen_flags: <defaults>
</compile_context>

<pallas_src>
import jax
import jax.numpy as jnp
from jax.experimental import pallas as pl
from jax.experimental.pallas import tpu as pltpu


def _round_up(x, m):
    return ((x + m - 1) // m) * m


def _generator_kernel(z_ref, w1_ref, b1_ref, w2_ref, b2_ref, out_ref):
    # Fused two-layer MLP on one (tile_b, tile_d) output tile.
    # h is recomputed per tile (cheap) so there is no cross-tile dependency.
    h = jnp.dot(z_ref[...], w1_ref[...], preferred_element_type=jnp.float32)
    h = h + b1_ref[...]
    h = jnp.maximum(h, 0.2 * h)                       # LeakyReLU(0.2), VPU max
    # bf16 for the 2nd MXU pass (f32 accumulation).  For very large hidden_dim
    # keep h in f32 if accuracy matters (bf16 rounding accumulates with H).
    o = jnp.dot(h.astype(jnp.bfloat16), w2_ref[...],
                preferred_element_type=jnp.float32)
    o = o + b2_ref[...]
    out_ref[...] = jnp.tanh(o).astype(out_ref.dtype)


def generator_forward(z, params, image_shape, out_dtype=jnp.bfloat16):
    """Pallas-backed forward pass of the MLP GAN generator.

    z:      (B, latent_dim) float32
    params: dict with w1 (L,H) bf16, b1 (H,) f32, w2 (H,D) bf16, b2 (D,) f32
    returns (B, C, H, W) in `out_dtype` (bf16 by default: tanh output is in
            [-1,1], so bf16 is ample for GAN images and halves HBM writeback).
    """
    B, L = z.shape
    H = params["w1"].shape[1]
    D = params["w2"].shape[1]
    C, Ih, Iw = image_shape
    assert D == C * Ih * Iw
    out_isz = jnp.dtype(out_dtype).itemsize

    # ---------------- generation-aware VMEM budget --------------------------
    try:
        cap = getattr(pltpu.get_tpu_info(), "vmem_capacity_bytes", None)
    except Exception:
        cap = None
    if not cap:
        cap = 64 * 1024 * 1024                       # conservative (v7x-sized)
    # ~60% of physical VMEM, clamped: v5e/v6e (128 MiB) -> ~76 MiB,
    # v7x (64 MiB) -> ~38 MiB.
    vmem_limit = max(32 * 1024 * 1024, min(int(cap * 0.6), 96 * 1024 * 1024))
    budget = int(vmem_limit * 0.7)                   # headroom for compiler scratch

    # ---------------- tile sizes --------------------------------------------
    # M tile: 256 rows fills the v6e/v7x 2x256^2 MXU (halves B-tile count);
    # 128 for mid batches (also fills v5e's 4x128^2); small batches pad to a
    # sublane multiple so blocks stay (8,128)-legal.
    if B >= 256:
        tile_b = 256
    elif B >= 128:
        tile_b = 128
    else:
        tile_b = _round_up(B, 8)
    b_pad = _round_up(B, tile_b)

    # N tile: largest lane-dense multiple of 128 whose buffers fit the budget
    # (w2 up to 3-deep, output up to 3-deep, b2 2-deep).  For small D this
    # collapses the D grid axis to a single step.
    d_pad0 = _round_up(D, 128)
    fixed = 2 * (L * H * 2 + H * 4 + tile_b * L * 2)          # w1 / b1 / z buffers
    per_d = 3 * H * 2 + 2 * 4 + 3 * tile_b * out_isz          # w2 / b2 / out per column
    tile_d = max(128, ((budget - fixed) // per_d) // 128 * 128)
    tile_d = min(tile_d, d_pad0)
    d_pad = _round_up(D, tile_d)

    grid_d = d_pad // tile_d
    grid_b = b_pad // tile_b
    # D is the OUTER grid axis: the w2 block index changes only with the outer
    # step, so w2 is streamed from HBM once total (not once per B tile).
    grid = (grid_d, grid_b)

    # ---------------- pad + cast operands -----------------------------------
    z_p = z.astype(jnp.bfloat16)                     # bf16 activations for MXU
    if b_pad != B:
        z_p = jnp.pad(z_p, ((0, b_pad - B), (0, 0)))

    w1 = params["w1"].astype(jnp.bfloat16)
    b1 = params["b1"].astype(jnp.float32).reshape(1, H)
    w2 = params["w2"].astype(jnp.bfloat16)
    b2 = params["b2"].astype(jnp.float32).reshape(1, D)
    if d_pad != D:
        w2 = jnp.pad(w2, ((0, 0), (0, d_pad - D)))
        b2 = jnp.pad(b2, ((0, 0), (0, d_pad - D)))

    # ---------------- block specs --------------------------------------------
    w2_kwargs = {}
    if grid_d > 2:
        # Deeper pipelining on the dominant HBM stream once there is enough
        # along the D axis to pipeline (matters most on bandwidth-starved v5e).
        w2_kwargs["pipeline_mode"] = pl.Buffered(3)
    out_kwargs = {}
    if grid_d * grid_b > 2:
        out_kwargs["pipeline_mode"] = pl.Buffered(3)  # hide output writeback too

    in_specs = [
        pl.BlockSpec((tile_b, L), lambda d, b: (b, 0)),
        pl.BlockSpec((L, H), lambda d, b: (0, 0)),
        pl.BlockSpec((1, H), lambda d, b: (0, 0)),
        pl.BlockSpec((H, tile_d), lambda d, b: (0, d), **w2_kwargs),
        pl.BlockSpec((1, tile_d), lambda d, b: (0, d)),
    ]
    out_spec = pl.BlockSpec((tile_b, tile_d), lambda d, b: (b, d), **out_kwargs)

    cost = pl.CostEstimate(
        # h is recomputed once per D tile; w2 is read exactly once.
        flops=2 * grid_d * b_pad * L * H + 2 * b_pad * H * d_pad,
        transcendentals=b_pad * d_pad,
        bytes_accessed=(grid_d * z_p.size * 2 + w1.size * 2 + w2.size * 2
                        + b1.size * 4 + b2.size * 4 + b_pad * d_pad * out_isz),
    )

    out_flat = pl.pallas_call(
        _generator_kernel,
        out_shape=jax.ShapeDtypeStruct((b_pad, d_pad), out_dtype),
        grid_spec=pltpu.PrefetchScalarGridSpec(
            num_scalar_prefetch=0,
            grid=grid,
            in_specs=in_specs,
            out_specs=out_spec,
        ),
        compiler_params=pltpu.CompilerParams(
            # Every grid point is independent (h recomputed per tile), so both
            # axes can be sharded across v7x's 2 TensorCores — including the
            # single-B-tile, multi-D-tile small-batch regime.
            dimension_semantics=("parallel", "parallel"),
            vmem_limit_bytes=vmem_limit,
        ),
        cost_estimate=cost,
    )(z_p, w1, b1, w2, b2)

    return out_flat[:B, :D].reshape(B, *image_shape)


def init_params(key, latent_dim, hidden_dim, image_shape):
    """Deterministic synthetic parameters (PyTorch nn.Linear stores (out,in);
    we transpose to (in,out) for the kernel).  Weights stored bf16 in HBM."""
    C, Ih, Iw = image_shape
    out_dim = C * Ih * Iw
    k1, k2, k3, k4 = jax.random.split(key, 4)
    w1_t = jax.random.normal(k1, (hidden_dim, latent_dim), jnp.float32) * 0.05
    b1 = jax.random.normal(k2, (hidden_dim,), jnp.float32) * 0.01
    w2_t = jax.random.normal(k3, (out_dim, hidden_dim), jnp.float32) * 0.05
    b2 = jax.random.normal(k4, (out_dim,), jnp.float32) * 0.01
    return {
        "w1": w1_t.T.astype(jnp.bfloat16),
        "b1": b1,
        "w2": w2_t.T.astype(jnp.bfloat16),
        "b2": b2,
    }


def reference_forward(z, params, image_shape):
    # f32 reference over the *same* (bf16-quantized) weights; remaining
    # deviation vs the kernel is bf16 rounding of z, h and the bf16 output.
    w1 = params["w1"].astype(jnp.float32)
    w2 = params["w2"].astype(jnp.float32)
    h = z @ w1 + params["b1"]
    h = jnp.where(h > 0, h, 0.2 * h)
    o = h @ w2 + params["b2"]
    return jnp.tanh(o).reshape(z.shape[0], *image_shape)


if __name__ == "__main__":
    image_shape = (1, 32, 32)   # (C, H, W) -> D = 1024
    latent_dim = 32
    hidden_dim = 128
    batch = 16

    key = jax.random.PRNGKey(0)
    kz, kp = jax.random.split(key)
    z = jax.random.normal(kz, (batch, latent_dim), jnp.float32)
    params = init_params(kp, latent_dim, hidden_dim, image_shape)

    img = generator_forward(z, params, image_shape)
    img = jax.block_until_ready(img)

    ref = reference_forward(z, params, image_shape)
    assert img.shape == (batch, *image_shape)
    err = jnp.max(jnp.abs(img.astype(jnp.float32) - ref))
    assert jnp.allclose(img.astype(jnp.float32), ref, atol=3e-2, rtol=3e-2), float(err)

    print("KERNEL_OK")
</pallas_src>

<mosaic_0001>
module attributes {stable_mosaic.version = 11 : i64} {
  func.func @_generator_kernel(%arg0: i32, %arg1: i32, %arg2: memref<16x32xbf16, #tpu.memory_space<vmem>>, %arg3: memref<32x128xbf16, #tpu.memory_space<vmem>>, %arg4: memref<1x128xf32, #tpu.memory_space<vmem>>, %arg5: memref<128x1024xbf16, #tpu.memory_space<vmem>>, %arg6: memref<1x1024xf32, #tpu.memory_space<vmem>>, %arg7: memref<16x1024xbf16, #tpu.memory_space<vmem>>) attributes {dimension_semantics = [#tpu.dimension_semantics<parallel>, #tpu.dimension_semantics<parallel>], iteration_bounds = array<i64: 1, 1>, scalar_prefetch = 0 : i64, scratch_operands = 0 : i64, tpu.core_type = #tpu.core_type<tc>, window_params = [{transform_indices = @transform_0, window_bounds = array<i64: 16, 32>}, {pipeline_mode = #tpu.pipeline_mode<synchronous>, transform_indices = @transform_1, window_bounds = array<i64: 32, 128>}, {pipeline_mode = #tpu.pipeline_mode<synchronous>, transform_indices = @transform_2, window_bounds = array<i64: 1, 128>}, {transform_indices = @transform_3, window_bounds = array<i64: 128, 1024>}, {transform_indices = @transform_4, window_bounds = array<i64: 1, 1024>}, {transform_indices = @transform_5, window_bounds = array<i64: 16, 1024>}]} {
    %c0 = arith.constant 0 : index
    %c0_0 = arith.constant 0 : index
    %0 = vector.load %arg2[%c0, %c0_0] : memref<16x32xbf16, #tpu.memory_space<vmem>>, vector<16x32xbf16>
    %c0_1 = arith.constant 0 : index
    %c0_2 = arith.constant 0 : index
    %1 = vector.load %arg3[%c0_1, %c0_2] : memref<32x128xbf16, #tpu.memory_space<vmem>>, vector<32x128xbf16>
    %cst = arith.constant dense<0.000000e+00> : vector<16x128xf32>
    %2 = tpu.matmul %0, %1, %cst {dimension_numbers = #tpu.dot_dimension_numbers<[1], [0], [0], [1], [0, 0, 1, 1], [], []>} : vector<16x32xbf16>, vector<32x128xbf16>, vector<16x128xf32> -> vector<16x128xf32>
    %c0_3 = arith.constant 0 : index
    %c0_4 = arith.constant 0 : index
    %3 = vector.load %arg4[%c0_3, %c0_4] : memref<1x128xf32, #tpu.memory_space<vmem>>, vector<1x128xf32>
    %4 = vector.broadcast %3 : vector<1x128xf32> to vector<16x128xf32>
    %5 = arith.addf %2, %4 : vector<16x128xf32>
    %cst_5 = arith.constant 2.000000e-01 : f32
    %6 = vector.broadcast %cst_5 : f32 to vector<16x128xf32>
    %7 = arith.mulf %6, %5 : vector<16x128xf32>
    %8 = arith.maximumf %5, %7 : vector<16x128xf32>
    %9 = arith.truncf %8 : vector<16x128xf32> to vector<16x128xbf16>
    %c0_6 = arith.constant 0 : index
    %c0_7 = arith.constant 0 : index
    %10 = vector.load %arg5[%c0_6, %c0_7] : memref<128x1024xbf16, #tpu.memory_space<vmem>>, vector<128x1024xbf16>
    %cst_8 = arith.constant dense<0.000000e+00> : vector<16x1024xf32>
    %11 = tpu.matmul %9, %10, %cst_8 {dimension_numbers = #tpu.dot_dimension_numbers<[1], [0], [0], [1], [0, 0, 1, 1], [], []>} : vector<16x128xbf16>, vector<128x1024xbf16>, vector<16x1024xf32> -> vector<16x1024xf32>
    %c0_9 = arith.constant 0 : index
    %c0_10 = arith.constant 0 : index
    %12 = vector.load %arg6[%c0_9, %c0_10] : memref<1x1024xf32, #tpu.memory_space<vmem>>, vector<1x1024xf32>
    %13 = vector.broadcast %12 : vector<1x1024xf32> to vector<16x1024xf32>
    %14 = arith.addf %11, %13 : vector<16x1024xf32>
    %15 = math.tanh %14 : vector<16x1024xf32>
    %16 = arith.truncf %15 : vector<16x1024xf32> to vector<16x1024xbf16>
    %c0_11 = arith.constant 0 : index
    %c0_12 = arith.constant 0 : index
    %17 = vector.load %arg7[%c0_11, %c0_12] : memref<16x1024xbf16, #tpu.memory_space<vmem>>, vector<16x1024xbf16>
    tpu.vector_store %arg7[%c0_11, %c0_12], %16 {strides = array<i32>} : memref<16x1024xbf16, #tpu.memory_space<vmem>>, vector<16x1024xbf16>,
    return
  }
  func.func @transform_0(%arg0: i32, %arg1: i32) -> (i32, i32) {
    %c0_i32 = arith.constant 0 : i32
    %c0_i32_0 = arith.constant 0 : i32
    return %arg1, %c0_i32 : i32, i32
  }
  func.func @transform_1(%arg0: i32, %arg1: i32) -> (i32, i32) {
    %c0_i32 = arith.constant 0 : i32
    %c0_i32_0 = arith.constant 0 : i32
    %c0_i32_1 = arith.constant 0 : i32
    return %c0_i32, %c0_i32_0 : i32, i32
  }
  func.func @transform_2(%arg0: i32, %arg1: i32) -> (i32, i32) {
    %c0_i32 = arith.constant 0 : i32
    %c0_i32_0 = arith.constant 0 : i32
    %c0_i32_1 = arith.constant 0 : i32
    return %c0_i32, %c0_i32_0 : i32, i32
  }
  func.func @transform_3(%arg0: i32, %arg1: i32) -> (i32, i32) {
    %c0_i32 = arith.constant 0 : i32
    %c0_i32_0 = arith.constant 0 : i32
    return %c0_i32, %arg0 : i32, i32
  }
  func.func @transform_4(%arg0: i32, %arg1: i32) -> (i32, i32) {
    %c0_i32 = arith.constant 0 : i32
    %c0_i32_0 = arith.constant 0 : i32
    return %c0_i32, %arg0 : i32, i32
  }
  func.func @transform_5(%arg0: i32, %arg1: i32) -> (i32, i32) {
    %c0_i32 = arith.constant 0 : i32
    return %arg1, %arg0 : i32, i32
  }
}

</mosaic_0001>

<llo_original>
// kernel: tpu_custom_call.1
$region0: #{tpu_custom_call.1}
  #allocation0 [shape = 'u32[]', space=smem, size = 0x4, offset = 0x4, fixed_abs, tag = 'smem constant byte address 0x4 - core index']
  #allocation1 [shape = 'u32[72,128]{1,0:T(1,128)}', space=vmem, size = 0x9000, scoped, tag = 'internal scratch']
  %s0 = inlined_call_operand.hbm [shape: bf16[16,32], index: 0, kind: input, shape index: {}]
  %s1 = inlined_call_operand.hbm [shape: bf16[32,128], index: 1, kind: input, shape index: {}]
  %s2 = inlined_call_operand.vmem [shape: f32[1,128], index: 2, kind: input, shape index: {}]
  %s3 = inlined_call_operand.hbm [shape: bf16[128,1024], index: 3, kind: input, shape index: {}]
  %s4 = inlined_call_operand.hbm [shape: f32[1,1024], index: 4, kind: input, shape index: {}]
  %s5 = inlined_call_operand.hbm [shape: bf16[16,1024], index: 5, kind: output, shape index: {}]
  %s6 = sld [smem:[#allocation0]]
  $region46: #{tpu_custom_call.1} parent=0
    _
  %s8 = ssub.s32 1, %s6
  %s9 = scalar_select 0, %s8, %s6
  $region1: #{tpu_custom_call.1} parent=0
    #allocation2 [shape = 'u8[4096]{0}', space=vmem, size = 0x1000, scoped, tag = 'input window, operand 0, single buffered']
    #allocation3 [shape = 's32[1]{0}', space=sflag, size = 0x4, scoped, tag = 'scoped memory for tpu_custom_call.1']
    #allocation4 [shape = 's32[1]{0}', space=sflag, size = 0x4, scoped, tag = 'scoped memory for tpu_custom_call.1']
    #allocation5 [shape = 'u8[8192]{0}', space=vmem, size = 0x2000, scoped, tag = 'input window, operand 1, single buffered']
    #allocation6 [shape = 's32[1]{0}', space=sflag, size = 0x4, scoped, tag = 'scoped memory for tpu_custom_call.1']
    #allocation7 [shape = 'u8[262144]{0}', space=vmem, size = 0x40000, scoped, tag = 'input window, operand 3, single buffered']
    #allocation8 [shape = 'u8[4096]{0}', space=vmem, size = 0x1000, scoped, tag = 'input window, operand 4, single buffered']
    #allocation9 [shape = 's32[1]{0}', space=sflag, size = 0x4, scoped, tag = 'scoped memory for tpu_custom_call.1']
    #allocation10 [shape = 'u8[32768]{0}', space=vmem, size = 0x8000, scoped, tag = 'output window, operand 0, single buffered']
    %10 = vsyncpa [#allocation3], 0
    %11 = vsyncpa [#allocation6], 0
    %12 = vsyncpa [#allocation9], 0
    %13 = vsyncpa [#allocation4], 0
    // Predicated region
    $region2: #{tpu_custom_call.1} parent=1 // pred_check
      _
    $region3: #{tpu_custom_call.1} parent=1 // pred_check_branch
      %15 = sbr.rel (0) target = $region5
    $region4: #{tpu_custom_call.1} parent=1 // pred_region
      %17 = vsyncadd [#allocation3], 0
      %s18 = sshll.u32 %s0, 4
      %s19 = int_to_ptr.hbm [resolvable:$true] %s18
      %s20 = sshll.u32 [#allocation2], 4
      %s21 = int_to_ptr.vmem [resolvable:$true] %s20
      %26 = dma.hbm_to_vmem [thread:$0]  %s19, 128, %s21, [#allocation3], 64, 64, 4
    $region5: #{tpu_custom_call.1} parent=1 // pred_fallthru
      _
    // Predicated region
    $region6: #{tpu_custom_call.1} parent=1 // pred_check
      _
    $region7: #{tpu_custom_call.1} parent=1 // pred_check_branch
      %28 = sbr.rel (0) target = $region9
    $region8: #{tpu_custom_call.1} parent=1 // pred_region
      %30 = vsyncadd [#allocation6], 0
      %s31 = sshll.u32 %s1, 4
      %s32 = int_to_ptr.hbm [resolvable:$true] %s31
      %s33 = sshll.u32 [#allocation5], 4
      %s34 = int_to_ptr.vmem [resolvable:$true] %s33
      %39 = dma.hbm_to_vmem [thread:$0]  %s32, 256, %s34, [#allocation6], 64, 64, 4
    $region9: #{tpu_custom_call.1} parent=1 // pred_fallthru
      _
    // Predicated region
    $region10: #{tpu_custom_call.1} parent=1 // pred_check
      _
    $region11: #{tpu_custom_call.1} parent=1 // pred_check_branch
      %41 = sbr.rel (0) target = $region13
    $region12: #{tpu_custom_call.1} parent=1 // pred_region
      _
    $region13: #{tpu_custom_call.1} parent=1 // pred_fallthru
      _
    // Predicated region
    $region14: #{tpu_custom_call.1} parent=1 // pred_check
      _
    $region15: #{tpu_custom_call.1} parent=1 // pred_check_branch
      %43 = sbr.rel (0) target = $region17
    $region16: #{tpu_custom_call.1} parent=1 // pred_region
      %45 = vsyncadd [#allocation6], 0
      %s46 = sshll.u32 %s3, 4
      %s47 = int_to_ptr.hbm [resolvable:$true] %s46
      %s48 = sshll.u32 [#allocation7], 4
      %s49 = int_to_ptr.vmem [resolvable:$true] %s48
      %54 = dma.hbm_to_vmem [thread:$0]  %s47, 8192, %s49, [#allocation6], 512, 512, 32
    $region17: #{tpu_custom_call.1} parent=1 // pred_fallthru
      _
    // Predicated region
    $region18: #{tpu_custom_call.1} parent=1 // pred_check
      _
    $region19: #{tpu_custom_call.1} parent=1 // pred_check_branch
      %56 = sbr.rel (0) target = $region21
    $region20: #{tpu_custom_call.1} parent=1 // pred_region
      %58 = vsyncadd [#allocation9], 0
      %s60 = sshll.u32 %s4, 4
      %s61 = int_to_ptr.hbm [resolvable:$true] %s60
      %s62 = sshll.u32 [#allocation8], 4
      %s63 = int_to_ptr.vmem [resolvable:$true] %s62
      %65 = dma.hbm_to_vmem [thread:$0]  %s61, 128, %s63, [#allocation9]
    $region21: #{tpu_custom_call.1} parent=1 // pred_fallthru
      _
    // Predicated region
    $region22: #{tpu_custom_call.1} parent=1 // pred_check
      _
    $region23: #{tpu_custom_call.1} parent=1 // pred_check_branch
      %67 = sbr.rel (0) target = $region25
    $region24: #{tpu_custom_call.1} parent=1 // pred_region
      %69 = dma.done [#allocation3], 128
    $region25: #{tpu_custom_call.1} parent=1 // pred_fallthru
      _
    // Predicated region
    $region26: #{tpu_custom_call.1} parent=1 // pred_check
      _
    $region27: #{tpu_custom_call.1} parent=1 // pred_check_branch
      %71 = sbr.rel (0) target = $region29
    $region28: #{tpu_custom_call.1} parent=1 // pred_region
      %73 = dma.done [#allocation6], 256
    $region29: #{tpu_custom_call.1} parent=1 // pred_fallthru
      _
    // Predicated region
    $region30: #{tpu_custom_call.1} parent=1 // pred_check
      _
    $region31: #{tpu_custom_call.1} parent=1 // pred_check_branch
      %75 = sbr.rel (0) target = $region33
    $region32: #{tpu_custom_call.1} parent=1 // pred_region
      %77 = dma.done [#allocation6], 8192
    $region33: #{tpu_custom_call.1} parent=1 // pred_fallthru
      _
    // Predicated region
    $region34: #{tpu_custom_call.1} parent=1 // pred_check
      _
    $region35: #{tpu_custom_call.1} parent=1 // pred_check_branch
      %79 = sbr.rel (0) target = $region37
    $region36: #{tpu_custom_call.1} parent=1 // pred_region
      %81 = dma.done [#allocation9], 128
    $region37: #{tpu_custom_call.1} parent=1 // pred_fallthru
      _
    %v83 = vld [vmem:[#allocation2] sm:$0xf]
    %v84 = vld [vmem:[#allocation2 + $0x4] sm:$0xf]
    %v85 = vld [vmem:[#allocation5] sm:$0xf]
    %v86 = vld [vmem:[#allocation5 + $0x4] sm:$0xf]
    %v87 = vld [vmem:[#allocation5 + $0x8] sm:$0xf]
    %v88 = vld [vmem:[#allocation5 + $0xc] sm:$0xf]
    %v89 = vld [vmem:[%s2] sm:$0x1]
    %v91 = vperm.slane %v89, 0
    %v95 = vunpack.c.l.b16 %v83
    %v96 = vunpack.c.l.b16 %v84
    %v97 = vpack.c.b16 %v96, %v95
    %v102 = vunpack.c.l.b16 %v85
    %v103 = vunpack.c.l.b16 %v86
    %v104 = vunpack.c.l.b16 %v87
    %v105 = vunpack.c.l.b16 %v88
    %v106 = vpack.c.b16 %v103, %v102
    %v107 = vpack.c.b16 %v105, %v104
    %vm110 = vcmask 261120
    %v112 = vsel %vm110, %v97, 0
    %114 = vmatpush.bf16.msra.mxu0 0
    %115 = vmatpush.bf16.msra.mxu0 0
    %116 = vmatpush.bf16.msra.mxu0 0
    %117 = vmatpush.bf16.msra.mxu0 0
    %118 = vmatpush.bf16.msra.mxu0 0
    %119 = vmatpush.bf16.msra.mxu0 0
    %120 = vmatpush.bf16.msra.mxu0 %v107
    %121 = vmatpush.bf16.msra.mxu0 %v106
    %122 = vmatmul.bf16.gmra.mxu0 %v112
    %v123 = vpop.f32.mrf.mxu0
    %v124 = vadd.f32 %v91, %v123
    %v125 = vpop.f32.mrf.mxu0
    %v126 = vadd.f32 %v91, %v125
    %127 = vdwg.mxu0
    %v128 = vmul.f32 %v124, 0.2
    %v129 = vmul.f32 %v126, 0.2
    %v130 = vmax.f32 %v124, %v128
    %v131 = vmax.f32 %v126, %v129
    %v132 = vpack.c.bf16 %v131, %v130
    %v133 = vld [vmem:[#allocation7] sm:$0xff]
    %v134 = vld [vmem:[#allocation7 + $0x8] sm:$0xff]
    %v135 = vld [vmem:[#allocation7 + $0x10] sm:$0xff]
    %v136 = vld [vmem:[#allocation7 + $0x18] sm:$0xff]
    %v137 = vld [vmem:[#allocation7 + $0x20] sm:$0xff]
    %v138 = vld [vmem:[#allocation7 + $0x28] sm:$0xff]
    %v139 = vld [vmem:[#allocation7 + $0x30] sm:$0xff]
    %v140 = vld [vmem:[#allocation7 + $0x38] sm:$0xff]
    %v141 = vld [vmem:[#allocation7 + $0x40] sm:$0xff]
    %v142 = vld [vmem:[#allocation7 + $0x48] sm:$0xff]
    %v143 = vld [vmem:[#allocation7 + $0x50] sm:$0xff]
    %v144 = vld [vmem:[#allocation7 + $0x58] sm:$0xff]
    %v145 = vld [vmem:[#allocation7 + $0x60] sm:$0xff]
    %v146 = vld [vmem:[#allocation7 + $0x68] sm:$0xff]
    %v147 = vld [vmem:[#allocation7 + $0x70] sm:$0xff]
    %v148 = vld [vmem:[#allocation7 + $0x78] sm:$0xff]
    %v149 = vld [vmem:[#allocation7 + $0x80] sm:$0xff]
    %v150 = vld [vmem:[#allocation7 + $0x88] sm:$0xff]
    %v151 = vld [vmem:[#allocation7 + $0x90] sm:$0xff]
    %v152 = vld [vmem:[#allocation7 + $0x98] sm:$0xff]
    %v153 = vld [vmem:[#allocation7 + $0xa0] sm:$0xff]
    %v154 = vld [vmem:[#allocation7 + $0xa8] sm:$0xff]
    %v155 = vld [vmem:[#allocation7 + $0xb0] sm:$0xff]
    %v156 = vld [vmem:[#allocation7 + $0xb8] sm:$0xff]
    %v157 = vld [vmem:[#allocation7 + $0xc0] sm:$0xff]
    %v158 = vld [vmem:[#allocation7 + $0xc8] sm:$0xff]
    %v159 = vld [vmem:[#allocation7 + $0xd0] sm:$0xff]
    %v160 = vld [vmem:[#allocation7 + $0xd8] sm:$0xff]
    %v161 = vld [vmem:[#allocation7 + $0xe0] sm:$0xff]
    %v162 = vld [vmem:[#allocation7 + $0xe8] sm:$0xff]
    %v163 = vld [vmem:[#allocation7 + $0xf0] sm:$0xff]
    %v164 = vld [vmem:[#allocation7 + $0xf8] sm:$0xff]
    %v165 = vld [vmem:[#allocation7 + $0x100] sm:$0xff]
    %v166 = vld [vmem:[#allocation7 + $0x108] sm:$0xff]
    %v167 = vld [vmem:[#allocation7 + $0x110] sm:$0xff]
    %v168 = vld [vmem:[#allocation7 + $0x118] sm:$0xff]
    %v169 = vld [vmem:[#allocation7 + $0x120] sm:$0xff]
    %v170 = vld [vmem:[#allocation7 + $0x128] sm:$0xff]
    %v171 = vld [vmem:[#allocation7 + $0x130] sm:$0xff]
    %v172 = vld [vmem:[#allocation7 + $0x138] sm:$0xff]
    %v173 = vld [vmem:[#allocation7 + $0x140] sm:$0xff]
    %v174 = vld [vmem:[#allocation7 + $0x148] sm:$0xff]
    %v175 = vld [vmem:[#allocation7 + $0x150] sm:$0xff]
    %v176 = vld [vmem:[#allocation7 + $0x158] sm:$0xff]
    %v177 = vld [vmem:[#allocation7 + $0x160] sm:$0xff]
    %v178 = vld [vmem:[#allocation7 + $0x168] sm:$0xff]
    %v179 = vld [vmem:[#allocation7 + $0x170] sm:$0xff]
    %v180 = vld [vmem:[#allocation7 + $0x178] sm:$0xff]
    %v181 = vld [vmem:[#allocation7 + $0x180] sm:$0xff]
    %v182 = vld [vmem:[#allocation7 + $0x188] sm:$0xff]
    %v183 = vld [vmem:[#allocation7 + $0x190] sm:$0xff]
    %v184 = vld [vmem:[#allocation7 + $0x198] sm:$0xff]
    %v185 = vld [vmem:[#allocation7 + $0x1a0] sm:$0xff]
    %v186 = vld [vmem:[#allocation7 + $0x1a8] sm:$0xff]
    %v187 = vld [vmem:[#allocation7 + $0x1b0] sm:$0xff]
    %v188 = vld [vmem:[#allocation7 + $0x1b8] sm:$0xff]
    %v189 = vld [vmem:[#allocation7 + $0x1c0] sm:$0xff]
    %v190 = vld [vmem:[#allocation7 + $0x1c8] sm:$0xff]
    %v191 = vld [vmem:[#allocation7 + $0x1d0] sm:$0xff]
    %v192 = vld [vmem:[#allocation7 + $0x1d8] sm:$0xff]
    %v193 = vld [vmem:[#allocation7 + $0x1e0] sm:$0xff]
    %v194 = vld [vmem:[#allocation7 + $0x1e8] sm:$0xff]
    %v195 = vld [vmem:[#allocation7 + $0x1f0] sm:$0xff]
    %v196 = vld [vmem:[#allocation7 + $0x1f8] sm:$0xff]
    %v197 = vld [vmem:[#allocation8] sm:$0xff]
    %v199 = vperm.slane %v197, 0
    %v200 = vperm.slane %v197, 1
    %v201 = vperm.slane %v197, 2
    %v202 = vperm.slane %v197, 3
    %v203 = vperm.slane %v197, 4
    %v204 = vperm.slane %v197, 5
    %v205 = vperm.slane %v197, 6
    %v206 = vperm.slane %v197, 7
    %v279 = vunpack.c.l.b16 %v133
    %v280 = vunpack.c.h.b16 %v133
    %v281 = vunpack.c.l.b16 %v134
    %v282 = vunpack.c.h.b16 %v134
    %v283 = vunpack.c.l.b16 %v135
    %v284 = vunpack.c.h.b16 %v135
    %v285 = vunpack.c.l.b16 %v136
    %v286 = vunpack.c.h.b16 %v136
    %v287 = vunpack.c.l.b16 %v137
    %v288 = vunpack.c.h.b16 %v137
    %v289 = vunpack.c.l.b16 %v138
    %v290 = vunpack.c.h.b16 %v138
    %v291 = vunpack.c.l.b16 %v139
    %v292 = vunpack.c.h.b16 %v139
    %v293 = vunpack.c.l.b16 %v140
    %v294 = vunpack.c.h.b16 %v140
    %v295 = vunpack.c.l.b16 %v141
    %v296 = vunpack.c.h.b16 %v141
    %v297 = vunpack.c.l.b16 %v142
    %v298 = vunpack.c.h.b16 %v142
    %v299 = vunpack.c.l.b16 %v143
    %v300 = vunpack.c.h.b16 %v143
    %v301 = vunpack.c.l.b16 %v144
    %v302 = vunpack.c.h.b16 %v144
    %v303 = vunpack.c.l.b16 %v145
    %v304 = vunpack.c.h.b16 %v145
    %v305 = vunpack.c.l.b16 %v146
    %v306 = vunpack.c.h.b16 %v146
    %v307 = vunpack.c.l.b16 %v147
    %v308 = vunpack.c.h.b16 %v147
    %v309 = vunpack.c.l.b16 %v148
    %v310 = vunpack.c.h.b16 %v148
    %v311 = vunpack.c.l.b16 %v149
    %v312 = vunpack.c.h.b16 %v149
    %v313 = vunpack.c.l.b16 %v150
    %v314 = vunpack.c.h.b16 %v150
    %v315 = vunpack.c.l.b16 %v151
    %v316 = vunpack.c.h.b16 %v151
    %v317 = vunpack.c.l.b16 %v152
    %v318 = vunpack.c.h.b16 %v152
    %v319 = vunpack.c.l.b16 %v153
    %v320 = vunpack.c.h.b16 %v153
    %v321 = vunpack.c.l.b16 %v154
    %v322 = vunpack.c.h.b16 %v154
    %v323 = vunpack.c.l.b16 %v155
    %v324 = vunpack.c.h.b16 %v155
    %v325 = vunpack.c.l.b16 %v156
    %v326 = vunpack.c.h.b16 %v156
    %v327 = vunpack.c.l.b16 %v157
    %v328 = vunpack.c.h.b16 %v157
    %v329 = vunpack.c.l.b16 %v158
    %v330 = vunpack.c.h.b16 %v158
    %v331 = vunpack.c.l.b16 %v159
    %v332 = vunpack.c.h.b16 %v159
    %v333 = vunpack.c.l.b16 %v160
    %v334 = vunpack.c.h.b16 %v160
    %v335 = vunpack.c.l.b16 %v161
    %v336 = vunpack.c.h.b16 %v161
    %v337 = vunpack.c.l.b16 %v162
    %v338 = vunpack.c.h.b16 %v162
    %v339 = vunpack.c.l.b16 %v163
    %v340 = vunpack.c.h.b16 %v163
    %v341 = vunpack.c.l.b16 %v164
    %v342 = vunpack.c.h.b16 %v164
    %v343 = vunpack.c.l.b16 %v165
    %v344 = vunpack.c.h.b16 %v165
    %v345 = vunpack.c.l.b16 %v166
    %v346 = vunpack.c.h.b16 %v166
    %v347 = vunpack.c.l.b16 %v167
    %v348 = vunpack.c.h.b16 %v167
    %v349 = vunpack.c.l.b16 %v168
    %v350 = vunpack.c.h.b16 %v168
    %v351 = vunpack.c.l.b16 %v169
    %v352 = vunpack.c.h.b16 %v169
    %v353 = vunpack.c.l.b16 %v170
    %v354 = vunpack.c.h.b16 %v170
    %v355 = vunpack.c.l.b16 %v171
    %v356 = vunpack.c.h.b16 %v171
    %v357 = vunpack.c.l.b16 %v172
    %v358 = vunpack.c.h.b16 %v172
    %v359 = vunpack.c.l.b16 %v173
    %v360 = vunpack.c.h.b16 %v173
    %v361 = vunpack.c.l.b16 %v174
    %v362 = vunpack.c.h.b16 %v174
    %v363 = vunpack.c.l.b16 %v175
    %v364 = vunpack.c.h.b16 %v175
    %v365 = vunpack.c.l.b16 %v176
    %v366 = vunpack.c.h.b16 %v176
    %v367 = vunpack.c.l.b16 %v177
    %v368 = vunpack.c.h.b16 %v177
    %v369 = vunpack.c.l.b16 %v178
    %v370 = vunpack.c.h.b16 %v178
    %v371 = vunpack.c.l.b16 %v179
    %v372 = vunpack.c.h.b16 %v179
    %v373 = vunpack.c.l.b16 %v180
    %v374 = vunpack.c.h.b16 %v180
    %v375 = vunpack.c.l.b16 %v181
    %v376 = vunpack.c.h.b16 %v181
    %v377 = vunpack.c.l.b16 %v182
    %v378 = vunpack.c.h.b16 %v182
    %v379 = vunpack.c.l.b16 %v183
    %v380 = vunpack.c.h.b16 %v183
    %v381 = vunpack.c.l.b16 %v184
    %v382 = vunpack.c.h.b16 %v184
    %v383 = vunpack.c.l.b16 %v185
    %v384 = vunpack.c.h.b16 %v185
    %v385 = vunpack.c.l.b16 %v186
    %v386 = vunpack.c.h.b16 %v186
    %v387 = vunpack.c.l.b16 %v187
    %v388 = vunpack.c.h.b16 %v187
    %v389 = vunpack.c.l.b16 %v188
    %v390 = vunpack.c.h.b16 %v188
    %v391 = vunpack.c.l.b16 %v189
    %v392 = vunpack.c.h.b16 %v189
    %v393 = vunpack.c.l.b16 %v190
    %v394 = vunpack.c.h.b16 %v190
    %v395 = vunpack.c.l.b16 %v191
    %v396 = vunpack.c.h.b16 %v191
    %v397 = vunpack.c.l.b16 %v192
    %v398 = vunpack.c.h.b16 %v192
    %v399 = vunpack.c.l.b16 %v193
    %v400 = vunpack.c.h.b16 %v193
    %v401 = vunpack.c.l.b16 %v194
    %v402 = vunpack.c.h.b16 %v194
    %v403 = vunpack.c.l.b16 %v195
    %v404 = vunpack.c.h.b16 %v195
    %v405 = vunpack.c.l.b16 %v196
    %v406 = vunpack.c.h.b16 %v196
    %v407 = vpack.c.b16 %v287, %v279
    %v408 = vpack.c.b16 %v288, %v280
    %v409 = vpack.c.b16 %v289, %v281
    %v410 = vpack.c.b16 %v290, %v282
    %v411 = vpack.c.b16 %v291, %v283
    %v412 = vpack.c.b16 %v292, %v284
    %v413 = vpack.c.b16 %v293, %v285
    %v414 = vpack.c.b16 %v294, %v286
    %v415 = vpack.c.b16 %v303, %v295
    %v416 = vpack.c.b16 %v304, %v296
    %v417 = vpack.c.b16 %v305, %v297
    %v418 = vpack.c.b16 %v306, %v298
    %v419 = vpack.c.b16 %v307, %v299
    %v420 = vpack.c.b16 %v308, %v300
    %v421 = vpack.c.b16 %v309, %v301
    %v422 = vpack.c.b16 %v310, %v302
    %v423 = vpack.c.b16 %v319, %v311
    %v424 = vpack.c.b16 %v320, %v312
    %v425 = vpack.c.b16 %v321, %v313
    %v426 = vpack.c.b16 %v322, %v314
    %v427 = vpack.c.b16 %v323, %v315
    %v428 = vpack.c.b16 %v324, %v316
    %v429 = vpack.c.b16 %v325, %v317
    %v430 = vpack.c.b16 %v326, %v318
    %v431 = vpack.c.b16 %v335, %v327
    %v432 = vpack.c.b16 %v336, %v328
    %v433 = vpack.c.b16 %v337, %v329
    %v434 = vpack.c.b16 %v338, %v330
    %v435 = vpack.c.b16 %v339, %v331
    %v436 = vpack.c.b16 %v340, %v332
    %v437 = vpack.c.b16 %v341, %v333
    %v438 = vpack.c.b16 %v342, %v334
    %v439 = vpack.c.b16 %v351, %v343
    %v440 = vpack.c.b16 %v352, %v344
    %v441 = vpack.c.b16 %v353, %v345
    %v442 = vpack.c.b16 %v354, %v346
    %v443 = vpack.c.b16 %v355, %v347
    %v444 = vpack.c.b16 %v356, %v348
    %v445 = vpack.c.b16 %v357, %v349
    %v446 = vpack.c.b16 %v358, %v350
    %v447 = vpack.c.b16 %v367, %v359
    %v448 = vpack.c.b16 %v368, %v360
    %v449 = vpack.c.b16 %v369, %v361
    %v450 = vpack.c.b16 %v370, %v362
    %v451 = vpack.c.b16 %v371, %v363
    %v452 = vpack.c.b16 %v372, %v364
    %v453 = vpack.c.b16 %v373, %v365
    %v454 = vpack.c.b16 %v374, %v366
    %v455 = vpack.c.b16 %v383, %v375
    %v456 = vpack.c.b16 %v384, %v376
    %v457 = vpack.c.b16 %v385, %v377
    %v458 = vpack.c.b16 %v386, %v378
    %v459 = vpack.c.b16 %v387, %v379
    %v460 = vpack.c.b16 %v388, %v380
    %v461 = vpack.c.b16 %v389, %v381
    %v462 = vpack.c.b16 %v390, %v382
    %v463 = vpack.c.b16 %v399, %v391
    %v464 = vpack.c.b16 %v400, %v392
    %v465 = vpack.c.b16 %v401, %v393
    %v466 = vpack.c.b16 %v402, %v394
    %v467 = vpack.c.b16 %v403, %v395
    %v468 = vpack.c.b16 %v404, %v396
    %v469 = vpack.c.b16 %v405, %v397
    %v470 = vpack.c.b16 %v406, %v398
    %535 = vmatpush.bf16.msra.mxu0 %v463
    %536 = vmatpush.bf16.msra.mxu0 %v455
    %537 = vmatpush.bf16.msra.mxu0 %v447
    %538 = vmatpush.bf16.msra.mxu0 %v439
    %539 = vmatpush.bf16.msra.mxu0 %v431
    %540 = vmatpush.bf16.msra.mxu0 %v423
    %541 = vmatpush.bf16.msra.mxu0 %v415
    %542 = vmatpush.bf16.msra.mxu0 %v407
    %543 = vmatmul.bf16.gmra.mxu0 %v132
    %v544 = vpop.f32.mrf.mxu0
    %v545 = vadd.f32 %v199, %v544
    %v546 = vpop.f32.mrf.mxu0
    %v547 = vadd.f32 %v199, %v546
    %548 = vdwg.mxu0
    %549 = vmatpush.bf16.msra.mxu0 %v464
    %550 = vmatpush.bf16.msra.mxu0 %v456
    %551 = vmatpush.bf16.msra.mxu0 %v448
    %552 = vmatpush.bf16.msra.mxu0 %v440
    %553 = vmatpush.bf16.msra.mxu0 %v432
    %554 = vmatpush.bf16.msra.mxu0 %v424
    %555 = vmatpush.bf16.msra.mxu0 %v416
    %556 = vmatpush.bf16.msra.mxu0 %v408
    %557 = vmatmul.bf16.gmra.mxu0 %v132
    %v558 = vpop.f32.mrf.mxu0
    %v559 = vadd.f32 %v200, %v558
    %v560 = vpop.f32.mrf.mxu0
    %v561 = vadd.f32 %v200, %v560
    %562 = vdwg.mxu0
    %563 = vmatpush.bf16.msra.mxu0 %v465
    %564 = vmatpush.bf16.msra.mxu0 %v457
    %565 = vmatpush.bf16.msra.mxu0 %v449
    %566 = vmatpush.bf16.msra.mxu0 %v441
    %567 = vmatpush.bf16.msra.mxu0 %v433
    %568 = vmatpush.bf16.msra.mxu0 %v425
    %569 = vmatpush.bf16.msra.mxu0 %v417
    %570 = vmatpush.bf16.msra.mxu0 %v409
    %571 = vmatmul.bf16.gmra.mxu0 %v132
    %v572 = vpop.f32.mrf.mxu0
    %v573 = vadd.f32 %v201, %v572
    %v574 = vpop.f32.mrf.mxu0
    %v575 = vadd.f32 %v201, %v574
    %576 = vdwg.mxu0
    %577 = vmatpush.bf16.msra.mxu0 %v466
    %578 = vmatpush.bf16.msra.mxu0 %v458
    %579 = vmatpush.bf16.msra.mxu0 %v450
    %580 = vmatpush.bf16.msra.mxu0 %v442
    %581 = vmatpush.bf16.msra.mxu0 %v434
    %582 = vmatpush.bf16.msra.mxu0 %v426
    %583 = vmatpush.bf16.msra.mxu0 %v418
    %584 = vmatpush.bf16.msra.mxu0 %v410
    %585 = vmatmul.bf16.gmra.mxu0 %v132
    %v586 = vpop.f32.mrf.mxu0
    %v587 = vadd.f32 %v202, %v586
    %v588 = vpop.f32.mrf.mxu0
    %v589 = vadd.f32 %v202, %v588
    %590 = vdwg.mxu0
    %591 = vmatpush.bf16.msra.mxu0 %v467
    %592 = vmatpush.bf16.msra.mxu0 %v459
    %593 = vmatpush.bf16.msra.mxu0 %v451
    %594 = vmatpush.bf16.msra.mxu0 %v443
    %595 = vmatpush.bf16.msra.mxu0 %v435
    %596 = vmatpush.bf16.msra.mxu0 %v427
    %597 = vmatpush.bf16.msra.mxu0 %v419
    %598 = vmatpush.bf16.msra.mxu0 %v411
    %599 = vmatmul.bf16.gmra.mxu0 %v132
    %v600 = vpop.f32.mrf.mxu0
    %v601 = vadd.f32 %v203, %v600
    %v602 = vpop.f32.mrf.mxu0
    %v603 = vadd.f32 %v203, %v602
    %604 = vdwg.mxu0
    %605 = vmatpush.bf16.msra.mxu0 %v468
    %606 = vmatpush.bf16.msra.mxu0 %v460
    %607 = vmatpush.bf16.msra.mxu0 %v452
    %608 = vmatpush.bf16.msra.mxu0 %v444
    %609 = vmatpush.bf16.msra.mxu0 %v436
    %610 = vmatpush.bf16.msra.mxu0 %v428
    %611 = vmatpush.bf16.msra.mxu0 %v420
    %612 = vmatpush.bf16.msra.mxu0 %v412
    %613 = vmatmul.bf16.gmra.mxu0 %v132
    %v614 = vpop.f32.mrf.mxu0
    %v615 = vadd.f32 %v204, %v614
    %v616 = vpop.f32.mrf.mxu0
    %v617 = vadd.f32 %v204, %v616
    %618 = vdwg.mxu0
    %619 = vmatpush.bf16.msra.mxu0 %v469
    %620 = vmatpush.bf16.msra.mxu0 %v461
    %621 = vmatpush.bf16.msra.mxu0 %v453
    %622 = vmatpush.bf16.msra.mxu0 %v445
    %623 = vmatpush.bf16.msra.mxu0 %v437
    %624 = vmatpush.bf16.msra.mxu0 %v429
    %625 = vmatpush.bf16.msra.mxu0 %v421
    %626 = vmatpush.bf16.msra.mxu0 %v413
    %627 = vmatmul.bf16.gmra.mxu0 %v132
    %v628 = vpop.f32.mrf.mxu0
    %v629 = vadd.f32 %v205, %v628
    %v630 = vpop.f32.mrf.mxu0
    %v631 = vadd.f32 %v205, %v630
    %632 = vdwg.mxu0
    %633 = vmatpush.bf16.msra.mxu0 %v470
    %634 = vmatpush.bf16.msra.mxu0 %v462
    %635 = vmatpush.bf16.msra.mxu0 %v454
    %636 = vmatpush.bf16.msra.mxu0 %v446
    %637 = vmatpush.bf16.msra.mxu0 %v438
    %638 = vmatpush.bf16.msra.mxu0 %v430
    %639 = vmatpush.bf16.msra.mxu0 %v422
    %640 = vmatpush.bf16.msra.mxu0 %v414
    %641 = vmatmul.bf16.gmra.mxu0 %v132
    %v642 = vpop.f32.mrf.mxu0
    %v643 = vadd.f32 %v206, %v642
    %v644 = vpop.f32.mrf.mxu0
    %v645 = vadd.f32 %v206, %v644
    %646 = vdwg.mxu0
    %v647 = vtanh.pop %v545
    %v648 = vtanh.pop %v559
    %v649 = vtanh.pop %v573
    %v650 = vtanh.pop %v587
    %v651 = vtanh.pop %v601
    %v652 = vtanh.pop %v615
    %v653 = vtanh.pop %v629
    %v654 = vtanh.pop %v643
    %v655 = vtanh.pop %v547
    %v656 = vtanh.pop %v561
    %v657 = vtanh.pop %v575
    %v658 = vtanh.pop %v589
    %v659 = vtanh.pop %v603
    %v660 = vtanh.pop %v617
    %v661 = vtanh.pop %v631
    %v662 = vtanh.pop %v645
    %v663 = vpack.c.bf16 %v648, %v647
    %v664 = vpack.c.bf16 %v650, %v649
    %v665 = vpack.c.bf16 %v652, %v651
    %v666 = vpack.c.bf16 %v654, %v653
    %v667 = vpack.c.bf16 %v656, %v655
    %v668 = vpack.c.bf16 %v658, %v657
    %v669 = vpack.c.bf16 %v660, %v659
    %v670 = vpack.c.bf16 %v662, %v661
    %671 = vst [vmem:[#allocation10] sm:$0xff] %v663
    %672 = vst [vmem:[#allocation10 + $0x8] sm:$0xff] %v664
    %673 = vst [vmem:[#allocation10 + $0x10] sm:$0xff] %v665
    %674 = vst [vmem:[#allocation10 + $0x18] sm:$0xff] %v666
    %675 = vst [vmem:[#allocation10 + $0x20] sm:$0xff] %v667
    %676 = vst [vmem:[#allocation10 + $0x28] sm:$0xff] %v668
    %677 = vst [vmem:[#allocation10 + $0x30] sm:$0xff] %v669
    %678 = vst [vmem:[#allocation10 + $0x38] sm:$0xff] %v670
    // Predicated region
    $region38: #{tpu_custom_call.1} parent=1 // pred_check
      _
    $region39: #{tpu_custom_call.1} parent=1 // pred_check_branch
      %680 = sbr.rel (0) target = $region41
    $region40: #{tpu_custom_call.1} parent=1 // pred_region
      %682 = vsyncadd [#allocation4], 0
      %s683 = sshll.u32 [#allocation10], 4
      %s684 = int_to_ptr.vmem [resolvable:$true] %s683
      %s685 = sshll.u32 %s5, 4
      %s686 = int_to_ptr.hbm [resolvable:$true] %s685
      %691 = dma.vmem_to_hbm [thread:$0]  %s684, 1024, %s686, [#allocation4], 512, 512, 32
    $region41: #{tpu_custom_call.1} parent=1 // pred_fallthru
      _
    // Predicated region
    $region42: #{tpu_custom_call.1} parent=1 // pred_check
      _
    $region43: #{tpu_custom_call.1} parent=1 // pred_check_branch
      %693 = sbr.rel (0) target = $region45
    $region44: #{tpu_custom_call.1} parent=1 // pred_region
      %695 = dma.done [#allocation4], 1024
    $region45: #{tpu_custom_call.1} parent=1 // pred_fallthru
      _
    %696 = vsyncpa [#allocation3], 1
    %697 = vsyncpa [#allocation6], 1
    %698 = vsyncpa [#allocation9], 1
    %699 = vsyncpa [#allocation4], 1

</llo_original>
